<compile_context>
chip_gen: v5e
topology: v5e:2x2
jax: 0.10.0
libtpu: 0.0.40
codegen_flags: <defaults>
</compile_context>

<pallas_src>
import functools

import jax
import jax.numpy as jnp
import numpy as np
from jax.experimental import pallas as pl
from jax.experimental.pallas import tpu as pltpu


def _round_up(x, m):
    return ((x + m - 1) // m) * m


def _gated_blocks_kernel(x_ref, gate_ref, w_ref, expand_ref, reduce_ref, bias_ref,
                         out_ref, *, num_blocks, out_dim):
    """One batch tile: fused wide matmul over all blocks + gated block-sum."""
    x = x_ref[...].astype(jnp.bfloat16)        # (TN, I)  f32 in HBM, cast on VPU
    gate = gate_ref[...]                       # (TN, Bp) f32 (zero-padded rows)

    # Single wide MXU matmul for all B blocks, f32 accumulation.
    y = jnp.dot(x, w_ref[...], preferred_element_type=jnp.float32)       # (TN, B*O)

    # gate_wide[n, b*O+o] = gate[n, b]  — one tiny MXU matmul (no lane-extracts).
    gate_wide = jnp.dot(gate, expand_ref[...],
                        preferred_element_type=jnp.float32)               # (TN, B*O)
    prod = gate_wide * y                                                  # one wide VPU mul

    if out_dim % 128 == 0:
        # Lane-aligned slices -> pure VPU adds.
        acc = prod[:, 0:out_dim]
        for b in range(1, num_blocks):
            acc = acc + prod[:, b * out_dim:(b + 1) * out_dim]
    else:
        # sum_b prod[:, b*O+o] via a 0/1 reduction matmul (rides the MXU slot).
        acc = jnp.dot(prod.astype(jnp.bfloat16), reduce_ref[...],
                      preferred_element_type=jnp.float32)                 # (TN, O)

    # Bias folded as sum_b gate_b * bias_b  (tiny MXU matmul, no wide VPU add).
    acc = acc + jnp.dot(gate, bias_ref[...], preferred_element_type=jnp.float32)

    out_ref[...] = acc.astype(out_ref.dtype)


def gated_layer_forward(iput, emb, g_logits, weights, block_w, block_bias,
                        log_probs=0.0, extra_loss=0.0, tile_n=512):
    """Mirrors GatedLayer.forward (eval mode: q_net is None, dense branch)."""
    N, I = iput.shape
    T, B = g_logits.shape
    O = block_w.shape[-1]
    BO = B * O
    B_pad = max(8, _round_up(B, 8))      # sublane-aligned contraction dim for gate dots

    # --- get_g_logits / get_weight: gather (T,B) tables by task embedding ----
    g_sel = jnp.take(g_logits, emb[:, 0], axis=0)        # (N, B)
    _w_sel = jnp.take(weights, emb[:, 0], axis=0)        # parity with get_weight()
    del _w_sel                                           # (unused by the forward math)

    # --- get_choices(): deterministic soft gate (computed in XLA wrapper) ----
    gate = jax.nn.softmax(g_sel, axis=-1)                             # (N, B) f32
    log_gate = jax.nn.log_softmax(g_sel, axis=-1)
    new_log_probs = jnp.sum(gate * log_gate, axis=-1)                 # (N,)

    # --- fused weight layout + tiny constant matrices (VMEM-resident) --------
    w_flat = jnp.transpose(block_w, (1, 0, 2)).reshape(I, BO).astype(jnp.bfloat16)
    expand_mat = jnp.zeros((B_pad, BO), jnp.float32).at[:B].set(
        jnp.kron(jnp.eye(B, dtype=jnp.float32), jnp.ones((1, O), jnp.float32)))
    reduce_mat = jnp.kron(jnp.ones((B, 1), jnp.float32),
                          jnp.eye(O, dtype=jnp.float32)).astype(jnp.bfloat16)   # (B*O, O)
    bias_pad = jnp.zeros((B_pad, O), jnp.float32).at[:B].set(
        block_bias.astype(jnp.float32))
    gate_pad = jnp.zeros((N, B_pad), jnp.float32).at[:, :B].set(gate)  # tiny, fuses w/ softmax

    # --- batch tile selection (no padding of x; Pallas masks the last block) -
    x_bytes = jnp.dtype(iput.dtype).itemsize
    tile_n = max(16, min(int(tile_n), _round_up(N, 16)))
    tile_n = _round_up(tile_n, 16)
    if N >= 512:
        # At least 2 grid steps so the "parallel" axis shards across v7x's 2 TCs.
        tile_n = min(tile_n, _round_up(pl.cdiv(N, 2), 16))

    def _vmem_need(tn):
        tiles = tn * I * x_bytes + tn * B_pad * 4 + tn * O * 4   # pipelined blocks
        resident = I * BO * 2 + B_pad * BO * 4 + BO * O * 2 + B_pad * O * 4
        temps = 4 * tn * BO * 4                                  # y, gate_wide, prod + slack
        # Resident blocks are still double-buffered by the pipeline (constant index_map).
        return 2 * tiles + 2 * resident + temps

    while tile_n > 64 and _vmem_need(tile_n) > 36 * 1024 * 1024:
        tile_n = max(64, _round_up(tile_n // 2, 16))

    vmem_limit = int(min(48 * 1024 * 1024,
                         max(32 * 1024 * 1024, int(1.3 * _vmem_need(tile_n)))))

    grid = (pl.cdiv(N, tile_n),)

    out = pl.pallas_call(
        functools.partial(_gated_blocks_kernel, num_blocks=B, out_dim=O),
        grid=grid,
        in_specs=[
            pl.BlockSpec((tile_n, I), lambda i: (i, 0)),       # x tile (pipelined, f32)
            pl.BlockSpec((tile_n, B_pad), lambda i: (i, 0)),   # gate tile (pipelined, f32)
            pl.BlockSpec((I, BO), lambda i: (0, 0)),           # fused weights (resident, bf16)
            pl.BlockSpec((B_pad, BO), lambda i: (0, 0)),       # gate expansion 0/1 (resident)
            pl.BlockSpec((BO, O), lambda i: (0, 0)),           # block-sum reduction 0/1 (resident)
            pl.BlockSpec((B_pad, O), lambda i: (0, 0)),        # bias (resident)
        ],
        out_specs=pl.BlockSpec((tile_n, O), lambda i: (i, 0)),
        out_shape=jax.ShapeDtypeStruct((N, O), jnp.float32),
        compiler_params=pltpu.CompilerParams(
            dimension_semantics=("parallel",),   # shard batch tiles across TCs (v7x)
            vmem_limit_bytes=vmem_limit,
        ),
    )(iput, gate_pad, w_flat, expand_mat, reduce_mat, bias_pad)

    new_extra_loss = 0.0  # non-tensor => the detach()*log_probs branch is skipped
    return out, log_probs + new_log_probs, extra_loss + new_extra_loss


if __name__ == "__main__":
    # Small deterministic setup consistent with the module's N x I -> N x O shape.
    N, I, O = 8, 32, 16        # batch, input dim, output dim
    B = 4                      # number of blocks
    T = 3                      # task_count
    key = jax.random.PRNGKey(0)
    k_x, k_g, k_w, k_bw, k_bb, k_e = jax.random.split(key, 6)

    iput = jax.random.normal(k_x, (N, I), dtype=jnp.float32)
    emb = jax.random.randint(k_e, (N, 1), 0, T, dtype=jnp.int32)

    g_logits = jax.random.normal(k_g, (T, B), dtype=jnp.float32)     # self.g_logits
    weights = jax.random.normal(k_w, (T, B), dtype=jnp.float32)      # self.weights
    block_w = jax.random.normal(k_bw, (B, I, O), dtype=jnp.float32) * 0.1
    block_bias = jax.random.normal(k_bb, (B, O), dtype=jnp.float32) * 0.1

    out, new_log_probs, new_extra_loss = gated_layer_forward(
        iput, emb, g_logits, weights, block_w, block_bias,
        log_probs=jnp.zeros((N,), jnp.float32), extra_loss=0.0,
    )
    jax.block_until_ready(out)
    jax.block_until_ready(new_log_probs)

    # Pure-JAX f32 reference for the gated block sum (loose tol: bf16 matmul).
    g_sel_ref = jnp.take(g_logits, emb[:, 0], axis=0)
    gate_ref = jax.nn.softmax(g_sel_ref, axis=-1)
    y_ref = jnp.einsum('ni,bio->nbo', iput, block_w) + block_bias[None, :, :]
    out_ref = jnp.einsum('nb,nbo->no', gate_ref, y_ref)
    lp_ref = jnp.sum(gate_ref * jax.nn.log_softmax(g_sel_ref, axis=-1), axis=-1)

    assert out.shape == (N, O)
    assert new_log_probs.shape == (N,)
    np.testing.assert_allclose(np.asarray(out), np.asarray(out_ref),
                               atol=5e-2, rtol=5e-2)
    np.testing.assert_allclose(np.asarray(new_log_probs), np.asarray(lp_ref),
                               atol=1e-5, rtol=1e-5)
    print("KERNEL_OK")
</pallas_src>

<mosaic_0001>
module attributes {stable_mosaic.version = 11 : i64} {
  func.func @_gated_blocks_kernel(%arg0: i32, %arg1: memref<16x32xf32, #tpu.memory_space<vmem>>, %arg2: memref<16x8xf32, #tpu.memory_space<vmem>>, %arg3: memref<32x64xbf16, #tpu.memory_space<vmem>>, %arg4: memref<8x64xf32, #tpu.memory_space<vmem>>, %arg5: memref<64x16xbf16, #tpu.memory_space<vmem>>, %arg6: memref<8x16xf32, #tpu.memory_space<vmem>>, %arg7: memref<16x16xf32, #tpu.memory_space<vmem>>) attributes {dimension_semantics = [#tpu.dimension_semantics<parallel>], iteration_bounds = array<i64: 1>, scalar_prefetch = 0 : i64, scratch_operands = 0 : i64, tpu.core_type = #tpu.core_type<tc>, window_params = [{transform_indices = @transform_0, window_bounds = array<i64: 16, 32>}, {transform_indices = @transform_1, window_bounds = array<i64: 16, 8>}, {pipeline_mode = #tpu.pipeline_mode<synchronous>, transform_indices = @transform_2, window_bounds = array<i64: 32, 64>}, {pipeline_mode = #tpu.pipeline_mode<synchronous>, transform_indices = @transform_3, window_bounds = array<i64: 8, 64>}, {pipeline_mode = #tpu.pipeline_mode<synchronous>, transform_indices = @transform_4, window_bounds = array<i64: 64, 16>}, {pipeline_mode = #tpu.pipeline_mode<synchronous>, transform_indices = @transform_5, window_bounds = array<i64: 8, 16>}, {transform_indices = @transform_6, window_bounds = array<i64: 16, 16>}]} {
    %c0 = arith.constant 0 : index
    %c0_0 = arith.constant 0 : index
    %0 = vector.load %arg1[%c0, %c0_0] : memref<16x32xf32, #tpu.memory_space<vmem>>, vector<16x32xf32>
    %1 = arith.truncf %0 : vector<16x32xf32> to vector<16x32xbf16>
    %c0_1 = arith.constant 0 : index
    %c0_2 = arith.constant 0 : index
    %2 = vector.load %arg2[%c0_1, %c0_2] : memref<16x8xf32, #tpu.memory_space<vmem>>, vector<16x8xf32>
    %c0_3 = arith.constant 0 : index
    %c0_4 = arith.constant 0 : index
    %3 = vector.load %arg3[%c0_3, %c0_4] : memref<32x64xbf16, #tpu.memory_space<vmem>>, vector<32x64xbf16>
    %cst = arith.constant dense<0.000000e+00> : vector<16x64xf32>
    %4 = tpu.matmul %1, %3, %cst {dimension_numbers = #tpu.dot_dimension_numbers<[1], [0], [0], [1], [0, 0, 1, 1], [], []>} : vector<16x32xbf16>, vector<32x64xbf16>, vector<16x64xf32> -> vector<16x64xf32>
    %c0_5 = arith.constant 0 : index
    %c0_6 = arith.constant 0 : index
    %5 = vector.load %arg4[%c0_5, %c0_6] : memref<8x64xf32, #tpu.memory_space<vmem>>, vector<8x64xf32>
    %cst_7 = arith.constant dense<0.000000e+00> : vector<16x64xf32>
    %6 = tpu.matmul %2, %5, %cst_7 {dimension_numbers = #tpu.dot_dimension_numbers<[1], [0], [0], [1], [0, 0, 1, 1], [], []>} : vector<16x8xf32>, vector<8x64xf32>, vector<16x64xf32> -> vector<16x64xf32>
    %7 = arith.mulf %6, %4 : vector<16x64xf32>
    %8 = arith.truncf %7 : vector<16x64xf32> to vector<16x64xbf16>
    %c0_8 = arith.constant 0 : index
    %c0_9 = arith.constant 0 : index
    %9 = vector.load %arg5[%c0_8, %c0_9] : memref<64x16xbf16, #tpu.memory_space<vmem>>, vector<64x16xbf16>
    %cst_10 = arith.constant dense<0.000000e+00> : vector<16x16xf32>
    %10 = tpu.matmul %8, %9, %cst_10 {dimension_numbers = #tpu.dot_dimension_numbers<[1], [0], [0], [1], [0, 0, 1, 1], [], []>} : vector<16x64xbf16>, vector<64x16xbf16>, vector<16x16xf32> -> vector<16x16xf32>
    %c0_11 = arith.constant 0 : index
    %c0_12 = arith.constant 0 : index
    %11 = vector.load %arg6[%c0_11, %c0_12] : memref<8x16xf32, #tpu.memory_space<vmem>>, vector<8x16xf32>
    %cst_13 = arith.constant dense<0.000000e+00> : vector<16x16xf32>
    %12 = tpu.matmul %2, %11, %cst_13 {dimension_numbers = #tpu.dot_dimension_numbers<[1], [0], [0], [1], [0, 0, 1, 1], [], []>} : vector<16x8xf32>, vector<8x16xf32>, vector<16x16xf32> -> vector<16x16xf32>
    %13 = arith.addf %10, %12 : vector<16x16xf32>
    %c0_14 = arith.constant 0 : index
    %c0_15 = arith.constant 0 : index
    %14 = vector.load %arg7[%c0_14, %c0_15] : memref<16x16xf32, #tpu.memory_space<vmem>>, vector<16x16xf32>
    tpu.vector_store %arg7[%c0_14, %c0_15], %13 {strides = array<i32>} : memref<16x16xf32, #tpu.memory_space<vmem>>, vector<16x16xf32>,
    return
  }
  func.func @transform_0(%arg0: i32) -> (i32, i32) {
    %c0_i32 = arith.constant 0 : i32
    %c0_i32_0 = arith.constant 0 : i32
    return %arg0, %c0_i32 : i32, i32
  }
  func.func @transform_1(%arg0: i32) -> (i32, i32) {
    %c0_i32 = arith.constant 0 : i32
    %c0_i32_0 = arith.constant 0 : i32
    return %arg0, %c0_i32 : i32, i32
  }
  func.func @transform_2(%arg0: i32) -> (i32, i32) {
    %c0_i32 = arith.constant 0 : i32
    %c0_i32_0 = arith.constant 0 : i32
    %c0_i32_1 = arith.constant 0 : i32
    return %c0_i32, %c0_i32_0 : i32, i32
  }
  func.func @transform_3(%arg0: i32) -> (i32, i32) {
    %c0_i32 = arith.constant 0 : i32
    %c0_i32_0 = arith.constant 0 : i32
    %c0_i32_1 = arith.constant 0 : i32
    return %c0_i32, %c0_i32_0 : i32, i32
  }
  func.func @transform_4(%arg0: i32) -> (i32, i32) {
    %c0_i32 = arith.constant 0 : i32
    %c0_i32_0 = arith.constant 0 : i32
    %c0_i32_1 = arith.constant 0 : i32
    return %c0_i32, %c0_i32_0 : i32, i32
  }
  func.func @transform_5(%arg0: i32) -> (i32, i32) {
    %c0_i32 = arith.constant 0 : i32
    %c0_i32_0 = arith.constant 0 : i32
    %c0_i32_1 = arith.constant 0 : i32
    return %c0_i32, %c0_i32_0 : i32, i32
  }
  func.func @transform_6(%arg0: i32) -> (i32, i32) {
    %c0_i32 = arith.constant 0 : i32
    %c0_i32_0 = arith.constant 0 : i32
    return %arg0, %c0_i32 : i32, i32
  }
}

</mosaic_0001>

<llo_original>
// kernel: tpu_custom_call.1
$region0: #{tpu_custom_call.1}
  #allocation0 [shape = 'u32[]', space=smem, size = 0x4, offset = 0x4, fixed_abs, tag = 'smem constant byte address 0x4 - core index']
  #allocation1 [shape = 'u32[72,128]{1,0:T(1,128)}', space=vmem, size = 0x9000, scoped, tag = 'internal scratch']
  %s0 = inlined_call_operand.vmem [shape: f32[8,32], index: 0, kind: input, shape index: {}]
  %s1 = inlined_call_operand.vmem [shape: f32[8,8], index: 1, kind: input, shape index: {}]
  %s2 = inlined_call_operand.vmem [shape: bf16[32,64], index: 2, kind: input, shape index: {}]
  %s3 = inlined_call_operand.vmem [shape: f32[8,64], index: 3, kind: input, shape index: {}]
  %s4 = inlined_call_operand.vmem [shape: bf16[64,16], index: 4, kind: input, shape index: {}]
  %s5 = inlined_call_operand.hbm [shape: f32[8,16], index: 5, kind: input, shape index: {}]
  %s6 = inlined_call_operand.hbm [shape: f32[8,16], index: 6, kind: output, shape index: {}]
  %s7 = sld [smem:[#allocation0]]
  $region38: #{tpu_custom_call.1} parent=0
    _
  %s9 = ssub.s32 1, %s7
  %s10 = scalar_select 0, %s9, %s7
  $region1: #{tpu_custom_call.1} parent=0
    #allocation2 [shape = 'u8[4096]{0}', space=vmem, size = 0x1000, scoped, tag = 'input window, operand 5, single buffered']
    #allocation3 [shape = 's32[1]{0}', space=sflag, size = 0x4, scoped, tag = 'scoped memory for tpu_custom_call.1']
    #allocation4 [shape = 's32[1]{0}', space=sflag, size = 0x4, scoped, tag = 'scoped memory for tpu_custom_call.1']
    #allocation5 [shape = 'u8[8192]{0}', space=vmem, size = 0x2000, scoped, tag = 'output window, operand 0, single buffered']
    %11 = vsyncpa [#allocation3], 0
    %12 = vsyncpa [#allocation4], 0
    // Predicated region
    $region2: #{tpu_custom_call.1} parent=1 // pred_check
      _
    $region3: #{tpu_custom_call.1} parent=1 // pred_check_branch
      %14 = sbr.rel (0) target = $region5
    $region4: #{tpu_custom_call.1} parent=1 // pred_region
      _
    $region5: #{tpu_custom_call.1} parent=1 // pred_fallthru
      _
    // Predicated region
    $region6: #{tpu_custom_call.1} parent=1 // pred_check
      _
    $region7: #{tpu_custom_call.1} parent=1 // pred_check_branch
      %16 = sbr.rel (0) target = $region9
    $region8: #{tpu_custom_call.1} parent=1 // pred_region
      _
    $region9: #{tpu_custom_call.1} parent=1 // pred_fallthru
      _
    // Predicated region
    $region10: #{tpu_custom_call.1} parent=1 // pred_check
      _
    $region11: #{tpu_custom_call.1} parent=1 // pred_check_branch
      %18 = sbr.rel (0) target = $region13
    $region12: #{tpu_custom_call.1} parent=1 // pred_region
      _
    $region13: #{tpu_custom_call.1} parent=1 // pred_fallthru
      _
    // Predicated region
    $region14: #{tpu_custom_call.1} parent=1 // pred_check
      _
    $region15: #{tpu_custom_call.1} parent=1 // pred_check_branch
      %20 = sbr.rel (0) target = $region17
    $region16: #{tpu_custom_call.1} parent=1 // pred_region
      _
    $region17: #{tpu_custom_call.1} parent=1 // pred_fallthru
      _
    // Predicated region
    $region18: #{tpu_custom_call.1} parent=1 // pred_check
      _
    $region19: #{tpu_custom_call.1} parent=1 // pred_check_branch
      %22 = sbr.rel (0) target = $region21
    $region20: #{tpu_custom_call.1} parent=1 // pred_region
      _
    $region21: #{tpu_custom_call.1} parent=1 // pred_fallthru
      _
    // Predicated region
    $region22: #{tpu_custom_call.1} parent=1 // pred_check
      _
    $region23: #{tpu_custom_call.1} parent=1 // pred_check_branch
      %24 = sbr.rel (0) target = $region25
    $region24: #{tpu_custom_call.1} parent=1 // pred_region
      %26 = vsyncadd [#allocation3], 0
      %s28 = sshll.u32 %s5, 4
      %s29 = int_to_ptr.hbm [resolvable:$true] %s28
      %s30 = sshll.u32 [#allocation2], 4
      %s31 = int_to_ptr.vmem [resolvable:$true] %s30
      %33 = dma.hbm_to_vmem [thread:$0]  %s29, 128, %s31, [#allocation3]
    $region25: #{tpu_custom_call.1} parent=1 // pred_fallthru
      _
    // Predicated region
    $region26: #{tpu_custom_call.1} parent=1 // pred_check
      _
    $region27: #{tpu_custom_call.1} parent=1 // pred_check_branch
      %35 = sbr.rel (0) target = $region29
    $region28: #{tpu_custom_call.1} parent=1 // pred_region
      %37 = dma.done [#allocation3], 128
    $region29: #{tpu_custom_call.1} parent=1 // pred_fallthru
      _
    %v39 = vld [vmem:[%s0] sm:$0xff]
    %v40 = vld [vmem:[%s0 + $0x8] sm:$0xff]
    %v41 = vpack.c.bf16 %v40, %v39
    %v42 = vld [vmem:[%s1] sm:$0xff]
    %v43 = vld [vmem:[%s1 + $0x8] sm:$0xff]
    %v44 = vld [vmem:[%s2] sm:$0xf]
    %v45 = vld [vmem:[%s2 + $0x4] sm:$0xf]
    %v46 = vld [vmem:[%s2 + $0x8] sm:$0xf]
    %v47 = vld [vmem:[%s2 + $0xc] sm:$0xf]
    %v52 = vunpack.c.l.b16 %v44
    %v53 = vunpack.c.l.b16 %v45
    %v54 = vunpack.c.l.b16 %v46
    %v55 = vunpack.c.l.b16 %v47
    %v56 = vpack.c.b16 %v53, %v52
    %v57 = vpack.c.b16 %v55, %v54
    %vm60 = vcmask 261120
    %v62 = vsel %vm60, %v41, 0
    %64 = vmatpush.bf16.msra.mxu0 0
    %65 = vmatpush.bf16.msra.mxu0 0
    %66 = vmatpush.bf16.msra.mxu0 0
    %67 = vmatpush.bf16.msra.mxu0 0
    %68 = vmatpush.bf16.msra.mxu0 0
    %69 = vmatpush.bf16.msra.mxu0 0
    %70 = vmatpush.bf16.msra.mxu0 %v57
    %71 = vmatpush.bf16.msra.mxu0 %v56
    %72 = vmatmul.bf16.gmra.mxu0 %v62
    %v73 = vpop.f32.mrf.mxu0
    %v74 = vadd.f32 0.0, %v73
    %v75 = vpop.f32.mrf.mxu0
    %v76 = vadd.f32 0.0, %v75
    %77 = vdwg.mxu0
    %v78 = vld [vmem:[%s3] sm:$0xff]
    %vm79 = vcmask 64512
    %v81 = vsel %vm79, %v42, 0
    %v84 = vsel %vm79, %v43, 0
    %86 = vmatpush.msra.mxu0 0.0
    %87 = vmatpush.msra.mxu0 0.0
    %88 = vmatpush.msra.mxu0 0.0
    %89 = vmatpush.msra.mxu0 0.0
    %90 = vmatpush.msra.mxu0 0.0
    %91 = vmatpush.msra.mxu0 0.0
    %92 = vmatpush.msra.mxu0 0.0
    %93 = vmatpush.msra.mxu0 0.0
    %94 = vmatpush.msra.mxu0 0.0
    %95 = vmatpush.msra.mxu0 0.0
    %96 = vmatpush.msra.mxu0 0.0
    %97 = vmatpush.msra.mxu0 0.0
    %98 = vmatpush.msra.mxu0 0.0
    %99 = vmatpush.msra.mxu0 0.0
    %100 = vmatpush.msra.mxu0 0.0
    %101 = vmatpush.msra.mxu0 %v78
    %102 = vmatmul.f32.gmra.mxu0 %v81
    %v103 = vpop.f32.mrf.mxu0
    %v104 = vadd.f32 0.0, %v103
    %105 = vmatmul.f32.gmra.mxu0 %v84
    %v106 = vpop.f32.mrf.mxu0
    %v107 = vadd.f32 0.0, %v106
    %108 = vdwg.mxu0
    %v109 = vmul.f32 %v104, %v74
    %v110 = vmul.f32 %v107, %v76
    %v111 = vpack.c.bf16 %v110, %v109
    %v112 = vld [vmem:[%s4] sm:$0xf]
    %v113 = vld [vmem:[%s4 + $0x4] sm:$0xf]
    %v114 = vld [vmem:[%s4 + $0x8] sm:$0xf]
    %v115 = vld [vmem:[%s4 + $0xc] sm:$0xf]
    %v116 = vld [vmem:[%s4 + $0x10] sm:$0xf]
    %v117 = vld [vmem:[%s4 + $0x14] sm:$0xf]
    %v118 = vld [vmem:[%s4 + $0x18] sm:$0xf]
    %v119 = vld [vmem:[%s4 + $0x1c] sm:$0xf]
    %v120 = vld [vmem:[#allocation2] sm:$0xff]
    %121 = vmatpush.msra.mxu0 0.0
    %122 = vmatpush.msra.mxu0 0.0
    %123 = vmatpush.msra.mxu0 0.0
    %124 = vmatpush.msra.mxu0 0.0
    %125 = vmatpush.msra.mxu0 0.0
    %126 = vmatpush.msra.mxu0 0.0
    %127 = vmatpush.msra.mxu0 0.0
    %128 = vmatpush.msra.mxu0 0.0
    %129 = vmatpush.msra.mxu0 0.0
    %130 = vmatpush.msra.mxu0 0.0
    %131 = vmatpush.msra.mxu0 0.0
    %132 = vmatpush.msra.mxu0 0.0
    %133 = vmatpush.msra.mxu0 0.0
    %134 = vmatpush.msra.mxu0 0.0
    %135 = vmatpush.msra.mxu0 0.0
    %136 = vmatpush.msra.mxu0 %v120
    %137 = vmatmul.f32.gmra.mxu0 %v81
    %v138 = vpop.f32.mrf.mxu0
    %v139 = vadd.f32 0.0, %v138
    %140 = vmatmul.f32.gmra.mxu0 %v84
    %v141 = vpop.f32.mrf.mxu0
    %v142 = vadd.f32 0.0, %v141
    %143 = vdwg.mxu0
    %v152 = vunpack.c.l.b16 %v112
    %v153 = vunpack.c.l.b16 %v113
    %v154 = vunpack.c.l.b16 %v114
    %v155 = vunpack.c.l.b16 %v115
    %v156 = vunpack.c.l.b16 %v116
    %v157 = vunpack.c.l.b16 %v117
    %v158 = vunpack.c.l.b16 %v118
    %v159 = vunpack.c.l.b16 %v119
    %v160 = vpack.c.b16 %v153, %v152
    %v161 = vpack.c.b16 %v155, %v154
    %v162 = vpack.c.b16 %v157, %v156
    %v163 = vpack.c.b16 %v159, %v158
    %vm168 = vcmask 523264
    %v170 = vsel %vm168, %v111, 0
    %172 = vmatpush.bf16.msra.mxu0 0
    %173 = vmatpush.bf16.msra.mxu0 0
    %174 = vmatpush.bf16.msra.mxu0 0
    %175 = vmatpush.bf16.msra.mxu0 0
    %176 = vmatpush.bf16.msra.mxu0 %v163
    %177 = vmatpush.bf16.msra.mxu0 %v162
    %178 = vmatpush.bf16.msra.mxu0 %v161
    %179 = vmatpush.bf16.msra.mxu0 %v160
    %180 = vmatmul.bf16.gmra.mxu0 %v170
    %v181 = vpop.f32.mrf.mxu0
    %v182 = vadd.f32 %v139, %v181
    %v183 = vpop.f32.mrf.mxu0
    %v184 = vadd.f32 %v142, %v183
    %185 = vdwg.mxu0
    %vm186 = vcmask 130048
    %187 = vst.msk [vmem:[#allocation5] sm:$0xff] %vm186, %v182
    %188 = vst.msk [vmem:[#allocation5 + $0x8] sm:$0xff] %vm186, %v184
    // Predicated region
    $region30: #{tpu_custom_call.1} parent=1 // pred_check
      _
    $region31: #{tpu_custom_call.1} parent=1 // pred_check_branch
      %190 = sbr.rel (0) target = $region33
    $region32: #{tpu_custom_call.1} parent=1 // pred_region
      %192 = vsyncadd [#allocation4], 128
      %s193 = sshll.u32 [#allocation5], 4
      %s194 = int_to_ptr.vmem [resolvable:$true] %s193
      %s195 = sshll.u32 %s6, 4
      %s196 = int_to_ptr.hbm [resolvable:$true] %s195
      %201 = dma.vmem_to_hbm [thread:$0]  %s194, 128, %s196, [#allocation4], 128, 128, 8
    $region33: #{tpu_custom_call.1} parent=1 // pred_fallthru
      _
    // Predicated region
    $region34: #{tpu_custom_call.1} parent=1 // pred_check
      _
    $region35: #{tpu_custom_call.1} parent=1 // pred_check_branch
      %203 = sbr.rel (0) target = $region37
    $region36: #{tpu_custom_call.1} parent=1 // pred_region
      %205 = dma.done [#allocation4], 256
    $region37: #{tpu_custom_call.1} parent=1 // pred_fallthru
      _
    %206 = vsyncpa [#allocation3], 1
    %207 = vsyncpa [#allocation4], 1

</llo_original>
